<compile_context>
chip_gen: v7x
topology: tpu7x:2x2x1
jax: 0.10.0
libtpu: 0.0.40
codegen_flags: <defaults>
</compile_context>

<pallas_src>
import jax
import jax.numpy as jnp
from jax.experimental import pallas as pl
from jax.experimental.pallas import tpu as pltpu


def _round_up(n, m):
    return ((n + m - 1) // m) * m


def mlp_kernel(x_ref, w1_ref, b1_ref, w2_ref, b2_ref, w3_ref, b3_ref, o_ref):
    # Natural batch-major tile [TB, INP]; bf16 for the MXU, f32 accumulation.
    h = x_ref[...].astype(jnp.bfloat16)

    # fc1 + LeakyReLU   (dropout == identity in eval mode)
    h = jnp.dot(h, w1_ref[...], preferred_element_type=jnp.float32) + b1_ref[...]
    h = jnp.maximum(h, 0.01 * h)

    # fc2 + LeakyReLU
    h = jnp.dot(h.astype(jnp.bfloat16), w2_ref[...],
                preferred_element_type=jnp.float32) + b2_ref[...]
    h = jnp.maximum(h, 0.01 * h)

    # fc3 + exact sigmoid (exp on the EUP; exp(-h)=inf for very negative h
    # gives 1/(1+inf) = 0, the correct limit).
    h = jnp.dot(h.astype(jnp.bfloat16), w3_ref[...],
                preferred_element_type=jnp.float32) + b3_ref[...]
    o_ref[...] = 1.0 / (1.0 + jnp.exp(-h))


def model_2hl_sigmoid_forward(x, params, *, max_batch_tile=4096, min_grid_steps=4):
    """x: [B, inp] float.  params in PyTorch layout: wN: [out, in], bN: [out]."""
    B, inp = x.shape
    h1 = params["w1"].shape[0]
    h2 = params["w2"].shape[0]
    out_dim = params["w3"].shape[0]

    # Batch tile: multiple of 128, large enough to amortize per-step overhead,
    # small enough that large B still yields >= min_grid_steps steps (v7x: the
    # "parallel" axis is what shards work across its 2 TensorCores).
    TB = max(128, min(max_batch_tile, _round_up(pl.cdiv(B, min_grid_steps), 128)))
    grid = (pl.cdiv(B, TB),)  # ragged last tile allowed; no padding of x.

    # Tiny parameter prep (few KB, one-time): weights -> [in, out] bf16 so the
    # kernel is a plain x @ w matmul; biases -> lane-aligned (1, out) f32 rows.
    w1 = params["w1"].T.astype(jnp.bfloat16)          # [inp, h1]
    w2 = params["w2"].T.astype(jnp.bfloat16)          # [h1,  h2]
    w3 = params["w3"].T.astype(jnp.bfloat16)          # [h2,  out]
    b1 = params["b1"].reshape(1, h1).astype(jnp.float32)
    b2 = params["b2"].reshape(1, h2).astype(jnp.float32)
    b3 = params["b3"].reshape(1, out_dim).astype(jnp.float32)

    # Constant index maps => params DMA'd once, VMEM-resident across steps.
    const = lambda a: pl.BlockSpec(a.shape, lambda i: (0, 0))

    # VMEM blocks pad their minor dim to 128 lanes, so the double-buffered
    # x/out working set is ~4 * TB * 128 * 4 bytes.  Below every generation's
    # default scoped-VMEM limit at TB <= 4096; raise explicitly if pushed.
    vmem_needed = 4 * TB * 128 * 4 + (2 << 20)
    vmem_limit = None if vmem_needed <= (14 << 20) else min(vmem_needed + (8 << 20), 56 << 20)

    grid_spec = pltpu.PrefetchScalarGridSpec(
        num_scalar_prefetch=0,
        grid=grid,
        in_specs=[
            # If a profile shows exposed DMA at step edges (v6e), deepen buffering:
            # pl.BlockSpec((TB, inp), lambda i: (i, 0), pipeline_mode=pl.Buffered(3)),
            pl.BlockSpec((TB, inp), lambda i: (i, 0)),
            const(w1), const(b1),
            const(w2), const(b2),
            const(w3), const(b3),
        ],
        out_specs=pl.BlockSpec((TB, out_dim), lambda i: (i, 0)),
    )

    return pl.pallas_call(
        mlp_kernel,
        out_shape=jax.ShapeDtypeStruct((B, out_dim), jnp.float32),
        grid_spec=grid_spec,
        compiler_params=pltpu.CompilerParams(
            dimension_semantics=("parallel",),
            vmem_limit_bytes=vmem_limit,
        ),
    )(x, w1, b1, w2, b2, w3, b3)


def init_params(key, inp, h1, h2, out):
    """Deterministic init mimicking nn.Linear defaults + kaiming_normal_ weights."""
    ks = jax.random.split(key, 6)

    def kaiming_w(k, fan_out, fan_in):
        # nn.init.kaiming_normal_ default: gain = sqrt(2), mode = fan_in.
        std = (2.0 / fan_in) ** 0.5
        return jax.random.normal(k, (fan_out, fan_in), jnp.float32) * std  # [out, in]

    def linear_b(k, fan_in, fan_out):
        # nn.Linear default bias init: U(-1/sqrt(fan_in), 1/sqrt(fan_in)).
        bound = 1.0 / (fan_in ** 0.5)
        return jax.random.uniform(k, (fan_out,), jnp.float32, -bound, bound)

    return {
        "w1": kaiming_w(ks[0], h1, inp), "b1": linear_b(ks[1], inp, h1),
        "w2": kaiming_w(ks[2], h2, h1),  "b2": linear_b(ks[3], h1, h2),
        "w3": kaiming_w(ks[4], out, h2), "b3": linear_b(ks[5], h2, out),
    }


if __name__ == "__main__":
    # Small shapes consistent with the MLP forward; B=384 -> 3 grid steps of
    # TB=128, exercising the pipelined grid and the "parallel" batch axis.
    B, INP, H1, H2, OUT, DR = 384, 16, 32, 32, 8, 0.1

    key = jax.random.PRNGKey(0)
    k_x, k_p = jax.random.split(key)
    x = jax.random.normal(k_x, (B, INP), jnp.float32)
    params = init_params(k_p, INP, H1, H2, OUT)

    y = jax.block_until_ready(model_2hl_sigmoid_forward(x, params))

    # Reference with matching numerics (bf16 matmul inputs, f32 accumulation,
    # f32 elementwise math, exact sigmoid).
    def ref(xv, p):
        def dense(h, w, b):
            return jnp.dot(h.astype(jnp.bfloat16), w.astype(jnp.bfloat16).T,
                           preferred_element_type=jnp.float32) + b
        h = dense(xv, p["w1"], p["b1"]); h = jnp.where(h > 0, h, 0.01 * h)
        h = dense(h,  p["w2"], p["b2"]); h = jnp.where(h > 0, h, 0.01 * h)
        return jax.nn.sigmoid(dense(h, p["w3"], p["b3"]))

    y_ref = ref(x, params)
    assert y.shape == (B, OUT)
    max_err = float(jnp.max(jnp.abs(y - y_ref)))
    assert jnp.allclose(y, y_ref, atol=5e-3, rtol=5e-3), f"max_err={max_err}"

    print("KERNEL_OK")
</pallas_src>

<mosaic_0001>
module attributes {stable_mosaic.version = 11 : i64} {
  func.func @mlp_kernel(%arg0: i32, %arg1: memref<128x16xf32, #tpu.memory_space<vmem>>, %arg2: memref<16x32xbf16, #tpu.memory_space<vmem>>, %arg3: memref<1x32xf32, #tpu.memory_space<vmem>>, %arg4: memref<32x32xbf16, #tpu.memory_space<vmem>>, %arg5: memref<1x32xf32, #tpu.memory_space<vmem>>, %arg6: memref<32x8xbf16, #tpu.memory_space<vmem>>, %arg7: memref<1x8xf32, #tpu.memory_space<vmem>>, %arg8: memref<128x8xf32, #tpu.memory_space<vmem>>) attributes {dimension_semantics = [#tpu.dimension_semantics<parallel>], iteration_bounds = array<i64: 3>, scalar_prefetch = 0 : i64, scratch_operands = 0 : i64, tpu.core_type = #tpu.core_type<tc>, window_params = [{transform_indices = @transform_0, window_bounds = array<i64: 128, 16>}, {pipeline_mode = #tpu.pipeline_mode<synchronous>, transform_indices = @transform_1, window_bounds = array<i64: 16, 32>}, {pipeline_mode = #tpu.pipeline_mode<synchronous>, transform_indices = @transform_2, window_bounds = array<i64: 1, 32>}, {pipeline_mode = #tpu.pipeline_mode<synchronous>, transform_indices = @transform_3, window_bounds = array<i64: 32, 32>}, {pipeline_mode = #tpu.pipeline_mode<synchronous>, transform_indices = @transform_4, window_bounds = array<i64: 1, 32>}, {pipeline_mode = #tpu.pipeline_mode<synchronous>, transform_indices = @transform_5, window_bounds = array<i64: 32, 8>}, {pipeline_mode = #tpu.pipeline_mode<synchronous>, transform_indices = @transform_6, window_bounds = array<i64: 1, 8>}, {transform_indices = @transform_7, window_bounds = array<i64: 128, 8>}]} {
    %c0 = arith.constant 0 : index
    %c0_0 = arith.constant 0 : index
    %0 = vector.load %arg1[%c0, %c0_0] : memref<128x16xf32, #tpu.memory_space<vmem>>, vector<128x16xf32>
    %1 = arith.truncf %0 : vector<128x16xf32> to vector<128x16xbf16>
    %c0_1 = arith.constant 0 : index
    %c0_2 = arith.constant 0 : index
    %2 = vector.load %arg2[%c0_1, %c0_2] : memref<16x32xbf16, #tpu.memory_space<vmem>>, vector<16x32xbf16>
    %cst = arith.constant dense<0.000000e+00> : vector<128x32xf32>
    %3 = tpu.matmul %1, %2, %cst {dimension_numbers = #tpu.dot_dimension_numbers<[1], [0], [0], [1], [0, 0, 1, 1], [], []>} : vector<128x16xbf16>, vector<16x32xbf16>, vector<128x32xf32> -> vector<128x32xf32>
    %c0_3 = arith.constant 0 : index
    %c0_4 = arith.constant 0 : index
    %4 = vector.load %arg3[%c0_3, %c0_4] : memref<1x32xf32, #tpu.memory_space<vmem>>, vector<1x32xf32>
    %5 = vector.broadcast %4 : vector<1x32xf32> to vector<128x32xf32>
    %6 = arith.addf %3, %5 : vector<128x32xf32>
    %cst_5 = arith.constant 0.00999999977 : f32
    %7 = vector.broadcast %cst_5 : f32 to vector<128x32xf32>
    %8 = arith.mulf %7, %6 : vector<128x32xf32>
    %9 = arith.maximumf %6, %8 : vector<128x32xf32>
    %10 = arith.truncf %9 : vector<128x32xf32> to vector<128x32xbf16>
    %c0_6 = arith.constant 0 : index
    %c0_7 = arith.constant 0 : index
    %11 = vector.load %arg4[%c0_6, %c0_7] : memref<32x32xbf16, #tpu.memory_space<vmem>>, vector<32x32xbf16>
    %cst_8 = arith.constant dense<0.000000e+00> : vector<128x32xf32>
    %12 = tpu.matmul %10, %11, %cst_8 {dimension_numbers = #tpu.dot_dimension_numbers<[1], [0], [0], [1], [0, 0, 1, 1], [], []>} : vector<128x32xbf16>, vector<32x32xbf16>, vector<128x32xf32> -> vector<128x32xf32>
    %c0_9 = arith.constant 0 : index
    %c0_10 = arith.constant 0 : index
    %13 = vector.load %arg5[%c0_9, %c0_10] : memref<1x32xf32, #tpu.memory_space<vmem>>, vector<1x32xf32>
    %14 = vector.broadcast %13 : vector<1x32xf32> to vector<128x32xf32>
    %15 = arith.addf %12, %14 : vector<128x32xf32>
    %cst_11 = arith.constant 0.00999999977 : f32
    %16 = vector.broadcast %cst_11 : f32 to vector<128x32xf32>
    %17 = arith.mulf %16, %15 : vector<128x32xf32>
    %18 = arith.maximumf %15, %17 : vector<128x32xf32>
    %19 = arith.truncf %18 : vector<128x32xf32> to vector<128x32xbf16>
    %c0_12 = arith.constant 0 : index
    %c0_13 = arith.constant 0 : index
    %20 = vector.load %arg6[%c0_12, %c0_13] : memref<32x8xbf16, #tpu.memory_space<vmem>>, vector<32x8xbf16>
    %cst_14 = arith.constant dense<0.000000e+00> : vector<128x8xf32>
    %21 = tpu.matmul %19, %20, %cst_14 {dimension_numbers = #tpu.dot_dimension_numbers<[1], [0], [0], [1], [0, 0, 1, 1], [], []>} : vector<128x32xbf16>, vector<32x8xbf16>, vector<128x8xf32> -> vector<128x8xf32>
    %c0_15 = arith.constant 0 : index
    %c0_16 = arith.constant 0 : index
    %22 = vector.load %arg7[%c0_15, %c0_16] : memref<1x8xf32, #tpu.memory_space<vmem>>, vector<1x8xf32>
    %23 = vector.broadcast %22 : vector<1x8xf32> to vector<128x8xf32>
    %24 = arith.addf %21, %23 : vector<128x8xf32>
    %cst_17 = arith.constant 0.000000e+00 : f32
    %25 = vector.broadcast %cst_17 : f32 to vector<128x8xf32>
    %26 = arith.subf %25, %24 : vector<128x8xf32>
    %27 = math.exp %26 : vector<128x8xf32>
    %cst_18 = arith.constant 1.000000e+00 : f32
    %28 = vector.broadcast %cst_18 : f32 to vector<128x8xf32>
    %29 = arith.addf %28, %27 : vector<128x8xf32>
    %cst_19 = arith.constant 1.000000e+00 : f32
    %30 = vector.broadcast %cst_19 : f32 to vector<128x8xf32>
    %31 = arith.divf %30, %29 : vector<128x8xf32>
    %c0_20 = arith.constant 0 : index
    %c0_21 = arith.constant 0 : index
    %32 = vector.load %arg8[%c0_20, %c0_21] : memref<128x8xf32, #tpu.memory_space<vmem>>, vector<128x8xf32>
    tpu.vector_store %arg8[%c0_20, %c0_21], %31 {strides = array<i32>} : memref<128x8xf32, #tpu.memory_space<vmem>>, vector<128x8xf32>,
    return
  }
  func.func @transform_0(%arg0: i32) -> (i32, i32) {
    %c0_i32 = arith.constant 0 : i32
    %c0_i32_0 = arith.constant 0 : i32
    return %arg0, %c0_i32 : i32, i32
  }
  func.func @transform_1(%arg0: i32) -> (i32, i32) {
    %c0_i32 = arith.constant 0 : i32
    %c0_i32_0 = arith.constant 0 : i32
    %c0_i32_1 = arith.constant 0 : i32
    return %c0_i32, %c0_i32_0 : i32, i32
  }
  func.func @transform_2(%arg0: i32) -> (i32, i32) {
    %c0_i32 = arith.constant 0 : i32
    %c0_i32_0 = arith.constant 0 : i32
    %c0_i32_1 = arith.constant 0 : i32
    return %c0_i32, %c0_i32_0 : i32, i32
  }
  func.func @transform_3(%arg0: i32) -> (i32, i32) {
    %c0_i32 = arith.constant 0 : i32
    %c0_i32_0 = arith.constant 0 : i32
    %c0_i32_1 = arith.constant 0 : i32
    return %c0_i32, %c0_i32_0 : i32, i32
  }
  func.func @transform_4(%arg0: i32) -> (i32, i32) {
    %c0_i32 = arith.constant 0 : i32
    %c0_i32_0 = arith.constant 0 : i32
    %c0_i32_1 = arith.constant 0 : i32
    return %c0_i32, %c0_i32_0 : i32, i32
  }
  func.func @transform_5(%arg0: i32) -> (i32, i32) {
    %c0_i32 = arith.constant 0 : i32
    %c0_i32_0 = arith.constant 0 : i32
    %c0_i32_1 = arith.constant 0 : i32
    return %c0_i32, %c0_i32_0 : i32, i32
  }
  func.func @transform_6(%arg0: i32) -> (i32, i32) {
    %c0_i32 = arith.constant 0 : i32
    %c0_i32_0 = arith.constant 0 : i32
    %c0_i32_1 = arith.constant 0 : i32
    return %c0_i32, %c0_i32_0 : i32, i32
  }
  func.func @transform_7(%arg0: i32) -> (i32, i32) {
    %c0_i32 = arith.constant 0 : i32
    %c0_i32_0 = arith.constant 0 : i32
    return %arg0, %c0_i32 : i32, i32
  }
}

</mosaic_0001>

<llo_original>
// kernel: tpu_custom_call.1
$region0: #{tpu_custom_call.1}
  #allocation0 [shape = 'u32[]', space=smem, size = 0x4, offset = 0x4, fixed_abs, tag = 'smem constant byte address 0x4 - core index']
  #allocation1 [shape = 'u32[144,128]{1,0:T(1,128)}', space=vmem, size = 0x12000, scoped, tag = 'internal scratch']
  %s0 = inlined_call_operand.vmem [shape: f32[384,16], index: 0, kind: input, shape index: {}]
  %s1 = inlined_call_operand.vmem [shape: bf16[16,32], index: 1, kind: input, shape index: {}]
  %s2 = inlined_call_operand.vmem [shape: f32[1,32], index: 2, kind: input, shape index: {}]
  %s3 = inlined_call_operand.vmem [shape: bf16[32,32], index: 3, kind: input, shape index: {}]
  %s4 = inlined_call_operand.vmem [shape: f32[1,32], index: 4, kind: input, shape index: {}]
  %s5 = inlined_call_operand.vmem [shape: bf16[32,8], index: 5, kind: input, shape index: {}]
  %s6 = inlined_call_operand.vmem [shape: f32[1,8], index: 6, kind: input, shape index: {}]
  %s7 = inlined_call_operand.vmem [shape: f32[384,8], index: 7, kind: output, shape index: {}]
  %s8 = sld [smem:[#allocation0]]
  $region61: #{tpu_custom_call.1} parent=0
    _
  %s10 = ssub.s32 1, %s8
  %s11 = scalar_select 0, %s10, %s8
  loop: start=0, step=1, limit=5
  $region2: #{tpu_custom_call.1} parent=0 // loop_pre_header
    _
  $region3: #{tpu_custom_call.1} parent=0 // loop_header
    %s13 = sphi 0, %s17
    %p14 = scmp.ge.s32.totalorder %s13, 5
    %s23 = sphi 0, %s25
    %s26 = sphi 0, %s23
    %s27 = sphi 0, %s26
    %s43 = sphi 0, %s27
    %s47 = sphi 0, %s47
    %s49 = sphi 0, %s47
    %s50 = sphi 0, %s49
    %s64 = sphi 0, %s50
    %s68 = sphi 0, %s68
    %s70 = sphi 0, %s68
    %s71 = sphi 0, %s70
    %s85 = sphi 0, %s71
    %s89 = sphi 0, %s89
    %s91 = sphi 0, %s89
    %s92 = sphi 0, %s91
    %s106 = sphi 0, %s92
    %s110 = sphi 0, %s110
    %s112 = sphi 0, %s110
    %s113 = sphi 0, %s112
    %s127 = sphi 0, %s113
    %s131 = sphi 0, %s131
    %s133 = sphi 0, %s131
    %s134 = sphi 0, %s133
    %s148 = sphi 0, %s134
    %s152 = sphi 0, %s152
    %s154 = sphi 0, %s152
    %s155 = sphi 0, %s154
    %s169 = sphi 0, %s155
    %s175 = sphi 0, %s177
    %s178 = sphi 0, %s175
    %s179 = sphi 0, %s178
    %s195 = sphi 0, %s179
  $region4: #{tpu_custom_call.1} parent=0 // loop_header_branch
    %16 = sbr.rel (%p14) target = $region8
  $region5: #{tpu_custom_call.1} parent=0 // loop_body
    %s18 = ssub.s32 %s13, 1
    %s19 = ssub.s32 %s13, 2
    %s20 = sadd.s32 %s13, 1
    %s21 = ssub.s32 %s13, %s20
    %p22 = scmp.eq.s32.totalorder %s21, 0
    %s24 = sadd.s32 %s23, 1
    %s25 = scalar_select %p22, %s23, %s24
    %p28 = pneg %p22
    %p29 = scmp.eq.s32.totalorder %s13, 2
    %p30 = por %p28, %p29
    %p31 = scmp.ne.s32.totalorder %s23, %s26
    %p32 = scmp.eq.s32.totalorder %s13, 0
    %p33 = por %p31, %p32
    %p34 = scmp.ne.s32.totalorder %s23, %s26
    %p35 = scmp.eq.s32.totalorder %s18, 2
    %p36 = por %p34, %p35
    %p37 = scmp.ne.s32.totalorder %s26, %s27
    %p38 = scmp.eq.s32.totalorder %s18, 0
    %p39 = por %p37, %p38
    %p40 = scmp.ne.s32.totalorder %s26, %s27
    %p41 = scmp.eq.s32.totalorder %s19, 2
    %p42 = por %p40, %p41
    %p44 = scmp.ne.s32.totalorder %s27, %s43
    %p45 = scmp.eq.s32.totalorder %s19, 0
    %p46 = por %p44, %p45
    %s48 = sadd.s32 %s47, 1
    %p51 = scmp.eq.s32.totalorder %s13, 2
    %p52 = scmp.ne.s32.totalorder %s47, %s49
    %p53 = scmp.eq.s32.totalorder %s13, 0
    %p54 = por %p52, %p53
    %p55 = scmp.ne.s32.totalorder %s47, %s49
    %p56 = scmp.eq.s32.totalorder %s18, 2
    %p57 = por %p55, %p56
    %p58 = scmp.ne.s32.totalorder %s49, %s50
    %p59 = scmp.eq.s32.totalorder %s18, 0
    %p60 = por %p58, %p59
    %p61 = scmp.ne.s32.totalorder %s49, %s50
    %p62 = scmp.eq.s32.totalorder %s19, 2
    %p63 = por %p61, %p62
    %p65 = scmp.ne.s32.totalorder %s50, %s64
    %p66 = scmp.eq.s32.totalorder %s19, 0
    %p67 = por %p65, %p66
    %s69 = sadd.s32 %s68, 1
    %p72 = scmp.eq.s32.totalorder %s13, 2
    %p73 = scmp.ne.s32.totalorder %s68, %s70
    %p74 = scmp.eq.s32.totalorder %s13, 0
    %p75 = por %p73, %p74
    %p76 = scmp.ne.s32.totalorder %s68, %s70
    %p77 = scmp.eq.s32.totalorder %s18, 2
    %p78 = por %p76, %p77
    %p79 = scmp.ne.s32.totalorder %s70, %s71
    %p80 = scmp.eq.s32.totalorder %s18, 0
    %p81 = por %p79, %p80
    %p82 = scmp.ne.s32.totalorder %s70, %s71
    %p83 = scmp.eq.s32.totalorder %s19, 2
    %p84 = por %p82, %p83
    %p86 = scmp.ne.s32.totalorder %s71, %s85
    %p87 = scmp.eq.s32.totalorder %s19, 0
    %p88 = por %p86, %p87
    %s90 = sadd.s32 %s89, 1
    %p93 = scmp.eq.s32.totalorder %s13, 2
    %p94 = scmp.ne.s32.totalorder %s89, %s91
    %p95 = scmp.eq.s32.totalorder %s13, 0
    %p96 = por %p94, %p95
    %p97 = scmp.ne.s32.totalorder %s89, %s91
    %p98 = scmp.eq.s32.totalorder %s18, 2
    %p99 = por %p97, %p98
    %p100 = scmp.ne.s32.totalorder %s91, %s92
    %p101 = scmp.eq.s32.totalorder %s18, 0
    %p102 = por %p100, %p101
    %p103 = scmp.ne.s32.totalorder %s91, %s92
    %p104 = scmp.eq.s32.totalorder %s19, 2
    %p105 = por %p103, %p104
    %p107 = scmp.ne.s32.totalorder %s92, %s106
    %p108 = scmp.eq.s32.totalorder %s19, 0
    %p109 = por %p107, %p108
    %s111 = sadd.s32 %s110, 1
    %p114 = scmp.eq.s32.totalorder %s13, 2
    %p115 = scmp.ne.s32.totalorder %s110, %s112
    %p116 = scmp.eq.s32.totalorder %s13, 0
    %p117 = por %p115, %p116
    %p118 = scmp.ne.s32.totalorder %s110, %s112
    %p119 = scmp.eq.s32.totalorder %s18, 2
    %p120 = por %p118, %p119
    %p121 = scmp.ne.s32.totalorder %s112, %s113
    %p122 = scmp.eq.s32.totalorder %s18, 0
    %p123 = por %p121, %p122
    %p124 = scmp.ne.s32.totalorder %s112, %s113
    %p125 = scmp.eq.s32.totalorder %s19, 2
    %p126 = por %p124, %p125
    %p128 = scmp.ne.s32.totalorder %s113, %s127
    %p129 = scmp.eq.s32.totalorder %s19, 0
    %p130 = por %p128, %p129
    %s132 = sadd.s32 %s131, 1
    %p135 = scmp.eq.s32.totalorder %s13, 2
    %p136 = scmp.ne.s32.totalorder %s131, %s133
    %p137 = scmp.eq.s32.totalorder %s13, 0
    %p138 = por %p136, %p137
    %p139 = scmp.ne.s32.totalorder %s131, %s133
    %p140 = scmp.eq.s32.totalorder %s18, 2
    %p141 = por %p139, %p140
    %p142 = scmp.ne.s32.totalorder %s133, %s134
    %p143 = scmp.eq.s32.totalorder %s18, 0
    %p144 = por %p142, %p143
    %p145 = scmp.ne.s32.totalorder %s133, %s134
    %p146 = scmp.eq.s32.totalorder %s19, 2
    %p147 = por %p145, %p146
    %p149 = scmp.ne.s32.totalorder %s134, %s148
    %p150 = scmp.eq.s32.totalorder %s19, 0
    %p151 = por %p149, %p150
    %s153 = sadd.s32 %s152, 1
    %p156 = scmp.eq.s32.totalorder %s13, 2
    %p157 = scmp.ne.s32.totalorder %s152, %s154
    %p158 = scmp.eq.s32.totalorder %s13, 0
    %p159 = por %p157, %p158
    %p160 = scmp.ne.s32.totalorder %s152, %s154
    %p161 = scmp.eq.s32.totalorder %s18, 2
    %p162 = por %p160, %p161
    %p163 = scmp.ne.s32.totalorder %s154, %s155
    %p164 = scmp.eq.s32.totalorder %s18, 0
    %p165 = por %p163, %p164
    %p166 = scmp.ne.s32.totalorder %s154, %s155
    %p167 = scmp.eq.s32.totalorder %s19, 2
    %p168 = por %p166, %p167
    %p170 = scmp.ne.s32.totalorder %s155, %s169
    %p171 = scmp.eq.s32.totalorder %s19, 0
    %p172 = por %p170, %p171
    %s173 = ssub.s32 %s13, %s20
    %p174 = scmp.eq.s32.totalorder %s173, 0
    %s176 = sadd.s32 %s175, 1
    %s177 = scalar_select %p174, %s175, %s176
    %p180 = pneg %p174
    %p181 = scmp.eq.s32.totalorder %s13, 2
    %p182 = por %p180, %p181
    %p183 = scmp.ne.s32.totalorder %s175, %s178
    %p184 = scmp.eq.s32.totalorder %s13, 0
    %p185 = por %p183, %p184
    %p186 = scmp.ne.s32.totalorder %s175, %s178
    %p187 = scmp.eq.s32.totalorder %s18, 2
    %p188 = por %p186, %p187
    %p189 = scmp.ne.s32.totalorder %s178, %s179
    %p190 = scmp.eq.s32.totalorder %s18, 0
    %p191 = por %p189, %p190
    %p192 = scmp.ne.s32.totalorder %s178, %s179
    %p193 = scmp.eq.s32.totalorder %s19, 2
    %p194 = por %p192, %p193
    %p196 = scmp.ne.s32.totalorder %s179, %s195
    %p197 = scmp.eq.s32.totalorder %s19, 0
    %p198 = por %p196, %p197
    %p199 = scmp.le.s32.totalorder 1, %s13
    %p200 = scmp.lt.s32.totalorder %s13, 4
    %p201 = pnand %p199, %p200
    %p202 = pneg %p201
    // Predicated region
    $region9: #{tpu_custom_call.1} parent=5 // pred_check
      _
    $region10: #{tpu_custom_call.1} parent=5 // pred_check_branch
      %204 = sbr.rel (%p201) target = $region12
    $region11: #{tpu_custom_call.1} parent=5 // pred_region
      %s205 = ssub.s32 %s13, 1
      // Predicated region
      $region13: #{tpu_custom_call.1} parent=11 // pred_check
        %p206 = pneg %p60
      $region14: #{tpu_custom_call.1} parent=11 // pred_check_branch
        %208 = sbr.rel (%p206) target = $region16
      $region15: #{tpu_custom_call.1} parent=11 // pred_region
        _
      $region16: #{tpu_custom_call.1} parent=11 // pred_fallthru
        _
      // Predicated region
      $region17: #{tpu_custom_call.1} parent=11 // pred_check
        %p209 = pneg %p81
      $region18: #{tpu_custom_call.1} parent=11 // pred_check_branch
        %211 = sbr.rel (%p209) target = $region20
      $region19: #{tpu_custom_call.1} parent=11 // pred_region
        _
      $region20: #{tpu_custom_call.1} parent=11 // pred_fallthru
        _
      // Predicated region
      $region21: #{tpu_custom_call.1} parent=11 // pred_check
        %p212 = pneg %p102
      $region22: #{tpu_custom_call.1} parent=11 // pred_check_branch
        %214 = sbr.rel (%p212) target = $region24
      $region23: #{tpu_custom_call.1} parent=11 // pred_region
        _
      $region24: #{tpu_custom_call.1} parent=11 // pred_fallthru
        _
      // Predicated region
      $region25: #{tpu_custom_call.1} parent=11 // pred_check
        %p215 = pneg %p123
      $region26: #{tpu_custom_call.1} parent=11 // pred_check_branch
        %217 = sbr.rel (%p215) target = $region28
      $region27: #{tpu_custom_call.1} parent=11 // pred_region
        _
      $region28: #{tpu_custom_call.1} parent=11 // pred_fallthru
        _
      // Predicated region
      $region29: #{tpu_custom_call.1} parent=11 // pred_check
        %p218 = pneg %p144
      $region30: #{tpu_custom_call.1} parent=11 // pred_check_branch
        %220 = sbr.rel (%p218) target = $region32
      $region31: #{tpu_custom_call.1} parent=11 // pred_region
        _
      $region32: #{tpu_custom_call.1} parent=11 // pred_fallthru
        _
      // Predicated region
      $region33: #{tpu_custom_call.1} parent=11 // pred_check
        %p221 = pneg %p165
      $region34: #{tpu_custom_call.1} parent=11 // pred_check_branch
        %223 = sbr.rel (%p221) target = $region36
      $region35: #{tpu_custom_call.1} parent=11 // pred_region
        _
      $region36: #{tpu_custom_call.1} parent=11 // pred_fallthru
        _
    $region12: #{tpu_custom_call.1} parent=5 // pred_fallthru
      _
    %p224 = scmp.lt.s32.totalorder %s13, 3
    // Predicated region
    $region37: #{tpu_custom_call.1} parent=5 // pred_check
      %p225 = pneg %p224
    $region38: #{tpu_custom_call.1} parent=5 // pred_check_branch
      %227 = sbr.rel (%p225) target = $region40
    $region39: #{tpu_custom_call.1} parent=5 // pred_region
      // Predicated region
      $region41: #{tpu_custom_call.1} parent=39 // pred_check
        %p228 = pneg %p33
      $region42: #{tpu_custom_call.1} parent=39 // pred_check_branch
        %230 = sbr.rel (%p228) target = $region44
      $region43: #{tpu_custom_call.1} parent=39 // pred_region
        %s231 = smul.u32 16, %s13
        %p232 = scmp.lt.s32.totalorder %s231, 47
        %s233 = scalar_select %p232, %s231, 47
        %s234 = smul.addr %s233, 8
        %s235 = scalar_lea.vmem %s0, %s234
        %s236 = smul.u32 16, %s13
      $region44: #{tpu_custom_call.1} parent=39 // pred_fallthru
        _
    $region40: #{tpu_custom_call.1} parent=5 // pred_fallthru
      _
    %p237 = scmp.le.s32.totalorder 1, %s13
    %p238 = scmp.lt.s32.totalorder %s13, 4
    %p239 = pnand %p237, %p238
    %p240 = pneg %p239
    // Predicated region
    $region45: #{tpu_custom_call.1} parent=5 // pred_check
      _
    $region46: #{tpu_custom_call.1} parent=5 // pred_check_branch
      %242 = sbr.rel (%p239) target = $region48
    $region47: #{tpu_custom_call.1} parent=5 // pred_region
      %s243 = ssub.s32 %s13, 1
      %s244 = smul.u32 16, %s18
      %p245 = scmp.lt.s32.totalorder %s244, 47
      %s246 = scalar_select %p245, %s244, 47
      %s247 = smul.addr %s246, 8
      %s248 = scalar_lea.vmem %s0, %s247
      %p249 = pneg %p39
      %p250 = pneg %p36
      %p251 = pneg %p60
      %p252 = pneg %p57
      %p253 = pneg %p81
      %p254 = pneg %p78
      %p255 = pneg %p102
      %p256 = pneg %p99
      %p257 = pneg %p123
      %p258 = pneg %p120
      %p259 = pneg %p144
      %p260 = pneg %p141
      %p261 = pneg %p165
      %p262 = pneg %p162
      %p263 = pneg %p191
      %p264 = pneg %p188
      %s265 = smul.u32 16, %s18
      %p266 = scmp.lt.s32.totalorder %s265, 47
      %s267 = scalar_select %p266, %s265, 47
      %s268 = smul.addr %s267, 8
      %s269 = scalar_lea.vmem %s7, %s268
      %s270 = smul.u32 16, %s18
      %p271 = scmp.lt.s32.totalorder %s270, 47
      %s272 = scalar_select %p271, %s270, 47
      %s273 = smul.addr %s272, 8
      %s274 = scalar_lea.vmem %s0, %s273
      %s275 = smul.u32 16, %s18
      %s276 = smul.u32 16, %s18
      %p277 = scmp.lt.s32.totalorder %s276, 47
      %s278 = scalar_select %p277, %s276, 47
      %s279 = smul.addr %s278, 8
      %s280 = scalar_lea.vmem %s7, %s279
      %s281 = smul.u32 16, %s18
      %v283 = vld [vmem:[%s274] sm:$0xff]
      %v284 = vld [vmem:[%s274 + $0x8] sm:$0xff]
      %v285 = vld [vmem:[%s274 + $0x10] sm:$0xff]
      %v286 = vld [vmem:[%s274 + $0x18] sm:$0xff]
      %v287 = vld [vmem:[%s274 + $0x20] sm:$0xff]
      %v288 = vld [vmem:[%s274 + $0x28] sm:$0xff]
      %v289 = vld [vmem:[%s274 + $0x30] sm:$0xff]
      %v290 = vld [vmem:[%s274 + $0x38] sm:$0xff]
      %v291 = vld [vmem:[%s274 + $0x40] sm:$0xff]
      %v292 = vld [vmem:[%s274 + $0x48] sm:$0xff]
      %v293 = vld [vmem:[%s274 + $0x50] sm:$0xff]
      %v294 = vld [vmem:[%s274 + $0x58] sm:$0xff]
      %v295 = vld [vmem:[%s274 + $0x60] sm:$0xff]
      %v296 = vld [vmem:[%s274 + $0x68] sm:$0xff]
      %v297 = vld [vmem:[%s274 + $0x70] sm:$0xff]
      %v298 = vld [vmem:[%s274 + $0x78] sm:$0xff]
      %v299 = vpack.c.bf16 %v284, %v283
      %v300 = vpack.c.bf16 %v286, %v285
      %v301 = vpack.c.bf16 %v288, %v287
      %v302 = vpack.c.bf16 %v290, %v289
      %v303 = vpack.c.bf16 %v292, %v291
      %v304 = vpack.c.bf16 %v294, %v293
      %v305 = vpack.c.bf16 %v296, %v295
      %v306 = vpack.c.bf16 %v298, %v297
      %v307 = vld [vmem:[%s1] sm:$0xf]
      %v308 = vld [vmem:[%s1 + $0x4] sm:$0xf]
      %v309 = vld [vmem:[%s2] sm:$0x1]
      %v311 = vlaneseq
      %v312 = vshrl.u32 %v311, 7
      %v313 = vsub.s32 0, %v312
      %v314 = vrot.slane %v309, %v313
      %v318 = vunpack.c.l.b16 %v307
      %v319 = vunpack.c.l.b16 %v308
      %v320 = vpack.c.b16 %v319, %v318
      %vm322 = vcmask 130048
      %v324 = vsel %vm322, %v299, 0
      %v327 = vsel %vm322, %v300, 0
      %v330 = vsel %vm322, %v301, 0
      %v333 = vsel %vm322, %v302, 0
      %v336 = vsel %vm322, %v303, 0
      %v339 = vsel %vm322, %v304, 0
      %v342 = vsel %vm322, %v305, 0
      %v345 = vsel %vm322, %v306, 0
      %347 = vmatprep.subr.bf16.mxu0 0
      %348 = vmatpush1.bf16.msra.mxu0 %v320
      %349 = vmatprep.subr.bf16.mxu0 0
      %350 = vmatpush1.bf16.msra.mxu0 0
      %351 = vmatprep.subr.bf16.mxu0 0
      %352 = vmatpush1.bf16.msra.mxu0 0
      %353 = vmatprep.subr.bf16.mxu0 0
      %354 = vmatpush1.bf16.msra.mxu0 0
      %355 = vmatprep.subr.bf16.mxu0 0
      %356 = vmatpush1.bf16.msra.mxu0 0
      %357 = vmatprep.subr.bf16.mxu0 0
      %358 = vmatpush1.bf16.msra.mxu0 0
      %359 = vmatprep.subr.bf16.mxu0 0
      %360 = vmatpush1.bf16.msra.mxu0 0
      %361 = vmatprep.subr.bf16.mxu0 0
      %362 = vmatpush1.bf16.msra.mxu0 0
      %363 = vmatprep.subr.bf16.mxu0 0
      %364 = vmatpush1.bf16.msra.mxu0 0
      %365 = vmatprep.subr.bf16.mxu0 0
      %366 = vmatpush1.bf16.msra.mxu0 0
      %367 = vmatprep.subr.bf16.mxu0 0
      %368 = vmatpush1.bf16.msra.mxu0 0
      %369 = vmatprep.subr.bf16.mxu0 0
      %370 = vmatpush1.bf16.msra.mxu0 0
      %371 = vmatprep.subr.bf16.mxu0 0
      %372 = vmatpush1.bf16.msra.mxu0 0
      %373 = vmatprep.subr.bf16.mxu0 0
      %374 = vmatpush1.bf16.msra.mxu0 0
      %375 = vmatprep.subr.bf16.mxu0 0
      %376 = vmatpush1.bf16.msra.mxu0 0
      %377 = vmatprep.subr.bf16.mxu0 0
      %378 = vmatpush1.bf16.msra.mxu0 0
      %379 = vmatprep.mubr.bf16.mxu0 0
      %380 = vmatmul.mubr.bf16.gmra.mrb[0].mxu0 %v324
      %v381 = vpop.f32.mrb[0].mxu0
      %v382 = vadd.f32 %v314, %v381
      %v383 = vpop.f32.mrb[0].mxu0
      %v384 = vpop.f32.mrb[0].mxu0
      %v385 = vadd.f32 %v314, %v384
      %v386 = vpop.f32.mrb[0].mxu0
      %387 = vmatprep.mubr.bf16.mxu0 0
      %388 = vmatmul.mubr.bf16.gmra.mrb[0].mxu0 %v327
      %v389 = vpop.f32.mrb[0].mxu0
      %v390 = vadd.f32 %v314, %v389
      %v391 = vpop.f32.mrb[0].mxu0
      %v392 = vpop.f32.mrb[0].mxu0
      %v393 = vadd.f32 %v314, %v392
      %v394 = vpop.f32.mrb[0].mxu0
      %395 = vmatprep.mubr.bf16.mxu0 0
      %396 = vmatmul.mubr.bf16.gmra.mrb[0].mxu0 %v330
      %v397 = vpop.f32.mrb[0].mxu0
      %v398 = vadd.f32 %v314, %v397
      %v399 = vpop.f32.mrb[0].mxu0
      %v400 = vpop.f32.mrb[0].mxu0
      %v401 = vadd.f32 %v314, %v400
      %v402 = vpop.f32.mrb[0].mxu0
      %403 = vmatprep.mubr.bf16.mxu0 0
      %404 = vmatmul.mubr.bf16.gmra.mrb[0].mxu0 %v333
      %v405 = vpop.f32.mrb[0].mxu0
      %v406 = vadd.f32 %v314, %v405
      %v407 = vpop.f32.mrb[0].mxu0
      %v408 = vpop.f32.mrb[0].mxu0
      %v409 = vadd.f32 %v314, %v408
      %v410 = vpop.f32.mrb[0].mxu0
      %411 = vmatprep.mubr.bf16.mxu0 0
      %412 = vmatmul.mubr.bf16.gmra.mrb[0].mxu0 %v336
      %v413 = vpop.f32.mrb[0].mxu0
      %v414 = vadd.f32 %v314, %v413
      %v415 = vpop.f32.mrb[0].mxu0
      %v416 = vpop.f32.mrb[0].mxu0
      %v417 = vadd.f32 %v314, %v416
      %v418 = vpop.f32.mrb[0].mxu0
      %419 = vmatprep.mubr.bf16.mxu0 0
      %420 = vmatmul.mubr.bf16.gmra.mrb[0].mxu0 %v339
      %v421 = vpop.f32.mrb[0].mxu0
      %v422 = vadd.f32 %v314, %v421
      %v423 = vpop.f32.mrb[0].mxu0
      %v424 = vpop.f32.mrb[0].mxu0
      %v425 = vadd.f32 %v314, %v424
      %v426 = vpop.f32.mrb[0].mxu0
      %427 = vmatprep.mubr.bf16.mxu0 0
      %428 = vmatmul.mubr.bf16.gmra.mrb[0].mxu0 %v342
      %v429 = vpop.f32.mrb[0].mxu0
      %v430 = vadd.f32 %v314, %v429
      %v431 = vpop.f32.mrb[0].mxu0
      %v432 = vpop.f32.mrb[0].mxu0
      %v433 = vadd.f32 %v314, %v432
      %v434 = vpop.f32.mrb[0].mxu0
      %435 = vmatprep.mubr.bf16.mxu0 0
      %436 = vmatmul.mubr.bf16.gmra.mrb[0].mxu0 %v345
      %v437 = vpop.f32.mrb[0].mxu0
      %v438 = vadd.f32 %v314, %v437
      %v439 = vpop.f32.mrb[0].mxu0
      %v440 = vpop.f32.mrb[0].mxu0
      %v441 = vadd.f32 %v314, %v440
      %v442 = vpop.f32.mrb[0].mxu0
      %443 = vdwg.mxu0
      %v444 = vmul.f32 %v382, 0.01
      %v445 = vmul.f32 %v385, 0.01
      %v446 = vmul.f32 %v390, 0.01
      %v447 = vmul.f32 %v393, 0.01
      %v448 = vmul.f32 %v398, 0.01
      %v449 = vmul.f32 %v401, 0.01
      %v450 = vmul.f32 %v406, 0.01
      %v451 = vmul.f32 %v409, 0.01
      %v452 = vmul.f32 %v414, 0.01
      %v453 = vmul.f32 %v417, 0.01
      %v454 = vmul.f32 %v422, 0.01
      %v455 = vmul.f32 %v425, 0.01
      %v456 = vmul.f32 %v430, 0.01
      %v457 = vmul.f32 %v433, 0.01
      %v458 = vmul.f32 %v438, 0.01
      %v459 = vmul.f32 %v441, 0.01
      %v460 = vmax.f32 %v382, %v444
      %v461 = vmax.f32 %v385, %v445
      %v462 = vmax.f32 %v390, %v446
      %v463 = vmax.f32 %v393, %v447
      %v464 = vmax.f32 %v398, %v448
      %v465 = vmax.f32 %v401, %v449
      %v466 = vmax.f32 %v406, %v450
      %v467 = vmax.f32 %v409, %v451
      %v468 = vmax.f32 %v414, %v452
      %v469 = vmax.f32 %v417, %v453
      %v470 = vmax.f32 %v422, %v454
      %v471 = vmax.f32 %v425, %v455
      %v472 = vmax.f32 %v430, %v456
      %v473 = vmax.f32 %v433, %v457
      %v474 = vmax.f32 %v438, %v458
      %v475 = vmax.f32 %v441, %v459
      %v476 = vpack.c.bf16 %v461, %v460
      %v477 = vpack.c.bf16 %v463, %v462
      %v478 = vpack.c.bf16 %v465, %v464
      %v479 = vpack.c.bf16 %v467, %v466
      %v480 = vpack.c.bf16 %v469, %v468
      %v481 = vpack.c.bf16 %v471, %v470
      %v482 = vpack.c.bf16 %v473, %v472
      %v483 = vpack.c.bf16 %v475, %v474
      %v484 = vld [vmem:[%s3] sm:$0xf]
      %v485 = vld [vmem:[%s3 + $0x4] sm:$0xf]
      %v486 = vld [vmem:[%s3 + $0x8] sm:$0xf]
      %v487 = vld [vmem:[%s3 + $0xc] sm:$0xf]
      %v488 = vld [vmem:[%s4] sm:$0x1]
      %v490 = vlaneseq
      %v491 = vshrl.u32 %v490, 7
      %v492 = vsub.s32 0, %v491
      %v493 = vrot.slane %v488, %v492
      %v499 = vunpack.c.l.b16 %v484
      %v500 = vunpack.c.l.b16 %v485
      %v501 = vunpack.c.l.b16 %v486
      %v502 = vunpack.c.l.b16 %v487
      %v503 = vpack.c.b16 %v500, %v499
      %v504 = vpack.c.b16 %v502, %v501
      %vm507 = vcmask 261120
      %v509 = vsel %vm507, %v476, 0
      %v512 = vsel %vm507, %v477, 0
      %v515 = vsel %vm507, %v478, 0
      %v518 = vsel %vm507, %v479, 0
      %v521 = vsel %vm507, %v480, 0
      %v524 = vsel %vm507, %v481, 0
      %v527 = vsel %vm507, %v482, 0
      %v530 = vsel %vm507, %v483, 0
      %532 = vmatprep.subr.bf16.mxu0 0
      %533 = vmatpush1.bf16.msra.mxu0 %v503
      %534 = vmatprep.subr.bf16.mxu0 0
      %535 = vmatpush1.bf16.msra.mxu0 %v504
      %536 = vmatprep.subr.bf16.mxu0 0
      %537 = vmatpush1.bf16.msra.mxu0 0
      %538 = vmatprep.subr.bf16.mxu0 0
      %539 = vmatpush1.bf16.msra.mxu0 0
      %540 = vmatprep.subr.bf16.mxu0 0
      %541 = vmatpush1.bf16.msra.mxu0 0
      %542 = vmatprep.subr.bf16.mxu0 0
      %543 = vmatpush1.bf16.msra.mxu0 0
      %544 = vmatprep.subr.bf16.mxu0 0
      %545 = vmatpush1.bf16.msra.mxu0 0
      %546 = vmatprep.subr.bf16.mxu0 0
      %547 = vmatpush1.bf16.msra.mxu0 0
      %548 = vmatprep.subr.bf16.mxu0 0
      %549 = vmatpush1.bf16.msra.mxu0 0
      %550 = vmatprep.subr.bf16.mxu0 0
      %551 = vmatpush1.bf16.msra.mxu0 0
      %552 = vmatprep.subr.bf16.mxu0 0
      %553 = vmatpush1.bf16.msra.mxu0 0
      %554 = vmatprep.subr.bf16.mxu0 0
      %555 = vmatpush1.bf16.msra.mxu0 0
      %556 = vmatprep.subr.bf16.mxu0 0
      %557 = vmatpush1.bf16.msra.mxu0 0
      %558 = vmatprep.subr.bf16.mxu0 0
      %559 = vmatpush1.bf16.msra.mxu0 0
      %560 = vmatprep.subr.bf16.mxu0 0
      %561 = vmatpush1.bf16.msra.mxu0 0
      %562 = vmatprep.subr.bf16.mxu0 0
      %563 = vmatpush1.bf16.msra.mxu0 0
      %564 = vmatprep.mubr.bf16.mxu0 0
      %565 = vmatmul.mubr.bf16.gmra.mrb[0].mxu0 %v509
      %v566 = vpop.f32.mrb[0].mxu0
      %v567 = vadd.f32 %v493, %v566
      %v568 = vpop.f32.mrb[0].mxu0
      %v569 = vpop.f32.mrb[0].mxu0
      %v570 = vadd.f32 %v493, %v569
      %v571 = vpop.f32.mrb[0].mxu0
      %572 = vmatprep.mubr.bf16.mxu0 0
      %573 = vmatmul.mubr.bf16.gmra.mrb[0].mxu0 %v512
      %v574 = vpop.f32.mrb[0].mxu0
      %v575 = vadd.f32 %v493, %v574
      %v576 = vpop.f32.mrb[0].mxu0
      %v577 = vpop.f32.mrb[0].mxu0
      %v578 = vadd.f32 %v493, %v577
      %v579 = vpop.f32.mrb[0].mxu0
      %580 = vmatprep.mubr.bf16.mxu0 0
      %581 = vmatmul.mubr.bf16.gmra.mrb[0].mxu0 %v515
      %v582 = vpop.f32.mrb[0].mxu0
      %v583 = vadd.f32 %v493, %v582
      %v584 = vpop.f32.mrb[0].mxu0
      %v585 = vpop.f32.mrb[0].mxu0
      %v586 = vadd.f32 %v493, %v585
      %v587 = vpop.f32.mrb[0].mxu0
      %588 = vmatprep.mubr.bf16.mxu0 0
      %589 = vmatmul.mubr.bf16.gmra.mrb[0].mxu0 %v518
      %v590 = vpop.f32.mrb[0].mxu0
      %v591 = vadd.f32 %v493, %v590
      %v592 = vpop.f32.mrb[0].mxu0
      %v593 = vpop.f32.mrb[0].mxu0
      %v594 = vadd.f32 %v493, %v593
      %v595 = vpop.f32.mrb[0].mxu0
      %596 = vmatprep.mubr.bf16.mxu0 0
      %597 = vmatmul.mubr.bf16.gmra.mrb[0].mxu0 %v521
      %v598 = vpop.f32.mrb[0].mxu0
      %v599 = vadd.f32 %v493, %v598
      %v600 = vpop.f32.mrb[0].mxu0
      %v601 = vpop.f32.mrb[0].mxu0
      %v602 = vadd.f32 %v493, %v601
      %v603 = vpop.f32.mrb[0].mxu0
      %604 = vmatprep.mubr.bf16.mxu0 0
      %605 = vmatmul.mubr.bf16.gmra.mrb[0].mxu0 %v524
      %v606 = vpop.f32.mrb[0].mxu0
      %v607 = vadd.f32 %v493, %v606
      %v608 = vpop.f32.mrb[0].mxu0
      %v609 = vpop.f32.mrb[0].mxu0
      %v610 = vadd.f32 %v493, %v609
      %v611 = vpop.f32.mrb[0].mxu0
      %612 = vmatprep.mubr.bf16.mxu0 0
      %613 = vmatmul.mubr.bf16.gmra.mrb[0].mxu0 %v527
      %v614 = vpop.f32.mrb[0].mxu0
      %v615 = vadd.f32 %v493, %v614
      %v616 = vpop.f32.mrb[0].mxu0
      %v617 = vpop.f32.mrb[0].mxu0
      %v618 = vadd.f32 %v493, %v617
      %v619 = vpop.f32.mrb[0].mxu0
      %620 = vmatprep.mubr.bf16.mxu0 0
      %621 = vmatmul.mubr.bf16.gmra.mrb[0].mxu0 %v530
      %v622 = vpop.f32.mrb[0].mxu0
      %v623 = vadd.f32 %v493, %v622
      %v624 = vpop.f32.mrb[0].mxu0
      %v625 = vpop.f32.mrb[0].mxu0
      %v626 = vadd.f32 %v493, %v625
      %v627 = vpop.f32.mrb[0].mxu0
      %628 = vdwg.mxu0
      %v629 = vmul.f32 %v567, 0.01
      %v630 = vmul.f32 %v570, 0.01
      %v631 = vmul.f32 %v575, 0.01
      %v632 = vmul.f32 %v578, 0.01
      %v633 = vmul.f32 %v583, 0.01
      %v634 = vmul.f32 %v586, 0.01
      %v635 = vmul.f32 %v591, 0.01
      %v636 = vmul.f32 %v594, 0.01
      %v637 = vmul.f32 %v599, 0.01
      %v638 = vmul.f32 %v602, 0.01
      %v639 = vmul.f32 %v607, 0.01
      %v640 = vmul.f32 %v610, 0.01
      %v641 = vmul.f32 %v615, 0.01
      %v642 = vmul.f32 %v618, 0.01
      %v643 = vmul.f32 %v623, 0.01
      %v644 = vmul.f32 %v626, 0.01
      %v645 = vmax.f32 %v567, %v629
      %v646 = vmax.f32 %v570, %v630
      %v647 = vmax.f32 %v575, %v631
      %v648 = vmax.f32 %v578, %v632
      %v649 = vmax.f32 %v583, %v633
      %v650 = vmax.f32 %v586, %v634
      %v651 = vmax.f32 %v591, %v635
      %v652 = vmax.f32 %v594, %v636
      %v653 = vmax.f32 %v599, %v637
      %v654 = vmax.f32 %v602, %v638
      %v655 = vmax.f32 %v607, %v639
      %v656 = vmax.f32 %v610, %v640
      %v657 = vmax.f32 %v615, %v641
      %v658 = vmax.f32 %v618, %v642
      %v659 = vmax.f32 %v623, %v643
      %v660 = vmax.f32 %v626, %v644
      %v661 = vpack.c.bf16 %v646, %v645
      %v662 = vpack.c.bf16 %v648, %v647
      %v663 = vpack.c.bf16 %v650, %v649
      %v664 = vpack.c.bf16 %v652, %v651
      %v665 = vpack.c.bf16 %v654, %v653
      %v666 = vpack.c.bf16 %v656, %v655
      %v667 = vpack.c.bf16 %v658, %v657
      %v668 = vpack.c.bf16 %v660, %v659
      %v669 = vld [vmem:[%s5] sm:$0xf]
      %v670 = vld [vmem:[%s5 + $0x4] sm:$0xf]
      %v671 = vld [vmem:[%s5 + $0x8] sm:$0xf]
      %v672 = vld [vmem:[%s5 + $0xc] sm:$0xf]
      %v673 = vld [vmem:[%s6] sm:$0x1]
      %v675 = vlaneseq
      %v676 = vshrl.u32 %v675, 7
      %v677 = vsub.s32 0, %v676
      %v678 = vrot.slane %v673, %v677
      %v684 = vunpack.c.l.b16 %v669
      %v685 = vunpack.c.l.b16 %v670
      %v686 = vunpack.c.l.b16 %v671
      %v687 = vunpack.c.l.b16 %v672
      %v688 = vpack.c.b16 %v685, %v684
      %v689 = vpack.c.b16 %v687, %v686
      %v693 = vsel %vm507, %v661, 0
      %v696 = vsel %vm507, %v662, 0
      %v699 = vsel %vm507, %v663, 0
      %v702 = vsel %vm507, %v664, 0
      %v705 = vsel %vm507, %v665, 0
      %v708 = vsel %vm507, %v666, 0
      %v711 = vsel %vm507, %v667, 0
      %v714 = vsel %vm507, %v668, 0
      %716 = vmatprep.subr.bf16.mxu0 0
      %717 = vmatpush1.bf16.msra.mxu0 %v688
      %718 = vmatprep.subr.bf16.mxu0 0
      %719 = vmatpush1.bf16.msra.mxu0 %v689
      %720 = vmatprep.subr.bf16.mxu0 0
      %721 = vmatpush1.bf16.msra.mxu0 0
      %722 = vmatprep.subr.bf16.mxu0 0
      %723 = vmatpush1.bf16.msra.mxu0 0
      %724 = vmatprep.subr.bf16.mxu0 0
      %725 = vmatpush1.bf16.msra.mxu0 0
      %726 = vmatprep.subr.bf16.mxu0 0
      %727 = vmatpush1.bf16.msra.mxu0 0
      %728 = vmatprep.subr.bf16.mxu0 0
      %729 = vmatpush1.bf16.msra.mxu0 0
      %730 = vmatprep.subr.bf16.mxu0 0
      %731 = vmatpush1.bf16.msra.mxu0 0
      %732 = vmatprep.subr.bf16.mxu0 0
      %733 = vmatpush1.bf16.msra.mxu0 0
      %734 = vmatprep.subr.bf16.mxu0 0
      %735 = vmatpush1.bf16.msra.mxu0 0
      %736 = vmatprep.subr.bf16.mxu0 0
      %737 = vmatpush1.bf16.msra.mxu0 0
      %738 = vmatprep.subr.bf16.mxu0 0
      %739 = vmatpush1.bf16.msra.mxu0 0
      %740 = vmatprep.subr.bf16.mxu0 0
      %741 = vmatpush1.bf16.msra.mxu0 0
      %742 = vmatprep.subr.bf16.mxu0 0
      %743 = vmatpush1.bf16.msra.mxu0 0
      %744 = vmatprep.subr.bf16.mxu0 0
      %745 = vmatpush1.bf16.msra.mxu0 0
      %746 = vmatprep.subr.bf16.mxu0 0
      %747 = vmatpush1.bf16.msra.mxu0 0
      %748 = vmatprep.mubr.bf16.mxu0 0
      %749 = vmatmul.mubr.bf16.gmra.mrb[0].mxu0 %v693
      %v750 = vpop.f32.mrb[0].mxu0
      %v751 = vadd.f32 %v678, %v750
      %v752 = vpop.f32.mrb[0].mxu0
      %v753 = vpop.f32.mrb[0].mxu0
      %v754 = vadd.f32 %v678, %v753
      %v755 = vpop.f32.mrb[0].mxu0
      %756 = vmatprep.mubr.bf16.mxu0 0
      %757 = vmatmul.mubr.bf16.gmra.mrb[0].mxu0 %v696
      %v758 = vpop.f32.mrb[0].mxu0
      %v759 = vadd.f32 %v678, %v758
      %v760 = vpop.f32.mrb[0].mxu0
      %v761 = vpop.f32.mrb[0].mxu0
      %v762 = vadd.f32 %v678, %v761
      %v763 = vpop.f32.mrb[0].mxu0
      %764 = vmatprep.mubr.bf16.mxu0 0
      %765 = vmatmul.mubr.bf16.gmra.mrb[0].mxu0 %v699
      %v766 = vpop.f32.mrb[0].mxu0
      %v767 = vadd.f32 %v678, %v766
      %v768 = vpop.f32.mrb[0].mxu0
      %v769 = vpop.f32.mrb[0].mxu0
      %v770 = vadd.f32 %v678, %v769
      %v771 = vpop.f32.mrb[0].mxu0
      %772 = vmatprep.mubr.bf16.mxu0 0
      %773 = vmatmul.mubr.bf16.gmra.mrb[0].mxu0 %v702
      %v774 = vpop.f32.mrb[0].mxu0
      %v775 = vadd.f32 %v678, %v774
      %v776 = vpop.f32.mrb[0].mxu0
      %v777 = vpop.f32.mrb[0].mxu0
      %v778 = vadd.f32 %v678, %v777
      %v779 = vpop.f32.mrb[0].mxu0
      %780 = vmatprep.mubr.bf16.mxu0 0
      %781 = vmatmul.mubr.bf16.gmra.mrb[0].mxu0 %v705
      %v782 = vpop.f32.mrb[0].mxu0
      %v783 = vadd.f32 %v678, %v782
      %v784 = vpop.f32.mrb[0].mxu0
      %v785 = vpop.f32.mrb[0].mxu0
      %v786 = vadd.f32 %v678, %v785
      %v787 = vpop.f32.mrb[0].mxu0
      %788 = vmatprep.mubr.bf16.mxu0 0
      %789 = vmatmul.mubr.bf16.gmra.mrb[0].mxu0 %v708
      %v790 = vpop.f32.mrb[0].mxu0
      %v791 = vadd.f32 %v678, %v790
      %v792 = vpop.f32.mrb[0].mxu0
      %v793 = vpop.f32.mrb[0].mxu0
      %v794 = vadd.f32 %v678, %v793
      %v795 = vpop.f32.mrb[0].mxu0
      %796 = vmatprep.mubr.bf16.mxu0 0
      %797 = vmatmul.mubr.bf16.gmra.mrb[0].mxu0 %v711
      %v798 = vpop.f32.mrb[0].mxu0
      %v799 = vadd.f32 %v678, %v798
      %v800 = vpop.f32.mrb[0].mxu0
      %v801 = vpop.f32.mrb[0].mxu0
      %v802 = vadd.f32 %v678, %v801
      %v803 = vpop.f32.mrb[0].mxu0
      %804 = vmatprep.mubr.bf16.mxu0 0
      %805 = vmatmul.mubr.bf16.gmra.mrb[0].mxu0 %v714
      %v806 = vpop.f32.mrb[0].mxu0
      %v807 = vadd.f32 %v678, %v806
      %v808 = vpop.f32.mrb[0].mxu0
      %v809 = vpop.f32.mrb[0].mxu0
      %v810 = vadd.f32 %v678, %v809
      %v811 = vpop.f32.mrb[0].mxu0
      %812 = vdwg.mxu0
      %v813 = vsub.f32 0.0, %v751
      %v814 = vsub.f32 0.0, %v754
      %v815 = vsub.f32 0.0, %v759
      %v816 = vsub.f32 0.0, %v762
      %v817 = vsub.f32 0.0, %v767
      %v818 = vsub.f32 0.0, %v770
      %v819 = vsub.f32 0.0, %v775
      %v820 = vsub.f32 0.0, %v778
      %v821 = vsub.f32 0.0, %v783
      %v822 = vsub.f32 0.0, %v786
      %v823 = vsub.f32 0.0, %v791
      %v824 = vsub.f32 0.0, %v794
      %v825 = vsub.f32 0.0, %v799
      %v826 = vsub.f32 0.0, %v802
      %v827 = vsub.f32 0.0, %v807
      %v828 = vsub.f32 0.0, %v810
      %v829 = vmul.f32 %v813, 1.442695
      %v830 = vpow.pop %v829
      %v831 = vmul.f32 %v814, 1.442695
      %v832 = vpow.pop %v831
      %v833 = vmul.f32 %v815, 1.442695
      %v834 = vpow.pop %v833
      %v835 = vmul.f32 %v816, 1.442695
      %v836 = vpow.pop %v835
      %v837 = vmul.f32 %v817, 1.442695
      %v838 = vpow.pop %v837
      %v839 = vmul.f32 %v818, 1.442695
      %v840 = vpow.pop %v839
      %v841 = vmul.f32 %v819, 1.442695
      %v842 = vpow.pop %v841
      %v843 = vmul.f32 %v820, 1.442695
      %v844 = vpow.pop %v843
      %v845 = vmul.f32 %v821, 1.442695
      %v846 = vpow.pop %v845
      %v847 = vmul.f32 %v822, 1.442695
      %v848 = vpow.pop %v847
      %v849 = vmul.f32 %v823, 1.442695
      %v850 = vpow.pop %v849
      %v851 = vmul.f32 %v824, 1.442695
      %v852 = vpow.pop %v851
      %v853 = vmul.f32 %v825, 1.442695
      %v854 = vpow.pop %v853
      %v855 = vmul.f32 %v826, 1.442695
      %v856 = vpow.pop %v855
      %v857 = vmul.f32 %v827, 1.442695
      %v858 = vpow.pop %v857
      %v859 = vmul.f32 %v828, 1.442695
      %v860 = vpow.pop %v859
      %v861 = vadd.f32 %v830, 1.0
      %v862 = vadd.f32 %v832, 1.0
      %v863 = vadd.f32 %v834, 1.0
      %v864 = vadd.f32 %v836, 1.0
      %v865 = vadd.f32 %v838, 1.0
      %v866 = vadd.f32 %v840, 1.0
      %v867 = vadd.f32 %v842, 1.0
      %v868 = vadd.f32 %v844, 1.0
      %v869 = vadd.f32 %v846, 1.0
      %v870 = vadd.f32 %v848, 1.0
      %v871 = vadd.f32 %v850, 1.0
      %v872 = vadd.f32 %v852, 1.0
      %v873 = vadd.f32 %v854, 1.0
      %v874 = vadd.f32 %v856, 1.0
      %v875 = vadd.f32 %v858, 1.0
      %v876 = vadd.f32 %v860, 1.0
      %v877 = vrcp.pop %v861
      %v878 = vmul.f32 1.0, %v877
      %v879 = vrcp.pop %v862
      %v880 = vmul.f32 1.0, %v879
      %v881 = vrcp.pop %v863
      %v882 = vmul.f32 1.0, %v881
      %v883 = vrcp.pop %v864
      %v884 = vmul.f32 1.0, %v883
      %v885 = vrcp.pop %v865
      %v886 = vmul.f32 1.0, %v885
      %v887 = vrcp.pop %v866
      %v888 = vmul.f32 1.0, %v887
      %v889 = vrcp.pop %v867
      %v890 = vmul.f32 1.0, %v889
      %v891 = vrcp.pop %v868
      %v892 = vmul.f32 1.0, %v891
      %v893 = vrcp.pop %v869
      %v894 = vmul.f32 1.0, %v893
      %v895 = vrcp.pop %v870
      %v896 = vmul.f32 1.0, %v895
      %v897 = vrcp.pop %v871
      %v898 = vmul.f32 1.0, %v897
      %v899 = vrcp.pop %v872
      %v900 = vmul.f32 1.0, %v899
      %v901 = vrcp.pop %v873
      %v902 = vmul.f32 1.0, %v901
      %v903 = vrcp.pop %v874
      %v904 = vmul.f32 1.0, %v903
      %v905 = vrcp.pop %v875
      %v906 = vmul.f32 1.0, %v905
      %v907 = vrcp.pop %v876
      %v908 = vmul.f32 1.0, %v907
      %vm909 = vcmask 64512
      %910 = vst.msk [vmem:[%s280] sm:$0xff] %vm909, %v878
      %911 = vst.msk [vmem:[%s280 + $0x8] sm:$0xff] %vm909, %v880
      %912 = vst.msk [vmem:[%s280 + $0x10] sm:$0xff] %vm909, %v882
      %913 = vst.msk [vmem:[%s280 + $0x18] sm:$0xff] %vm909, %v884
      %914 = vst.msk [vmem:[%s280 + $0x20] sm:$0xff] %vm909, %v886
      %915 = vst.msk [vmem:[%s280 + $0x28] sm:$0xff] %vm909, %v888
      %916 = vst.msk [vmem:[%s280 + $0x30] sm:$0xff] %vm909, %v890
      %917 = vst.msk [vmem:[%s280 + $0x38] sm:$0xff] %vm909, %v892
      %918 = vst.msk [vmem:[%s280 + $0x40] sm:$0xff] %vm909, %v894
      %919 = vst.msk [vmem:[%s280 + $0x48] sm:$0xff] %vm909, %v896
      %920 = vst.msk [vmem:[%s280 + $0x50] sm:$0xff] %vm909, %v898
      %921 = vst.msk [vmem:[%s280 + $0x58] sm:$0xff] %vm909, %v900
      %922 = vst.msk [vmem:[%s280 + $0x60] sm:$0xff] %vm909, %v902
      %923 = vst.msk [vmem:[%s280 + $0x68] sm:$0xff] %vm909, %v904
      %924 = vst.msk [vmem:[%s280 + $0x70] sm:$0xff] %vm909, %v906
      %925 = vst.msk [vmem:[%s280 + $0x78] sm:$0xff] %vm909, %v908
      %s926 = smul.u32 16, %s18
      %p927 = scmp.lt.s32.totalorder %s926, 47
      %s928 = scalar_select %p927, %s926, 47
      %s929 = smul.addr %s928, 8
      %s930 = scalar_lea.vmem %s7, %s929
      // Predicated region
      $region49: #{tpu_custom_call.1} parent=47 // pred_check
        %p931 = pneg %p188
      $region50: #{tpu_custom_call.1} parent=47 // pred_check_branch
        %933 = sbr.rel (%p931) target = $region52
      $region51: #{tpu_custom_call.1} parent=47 // pred_region
        %s934 = smul.u32 16, %s18
      $region52: #{tpu_custom_call.1} parent=47 // pred_fallthru
        _
    $region48: #{tpu_custom_call.1} parent=5 // pred_fallthru
      _
    %p935 = scmp.le.s32.totalorder 2, %s13
    // Predicated region
    $region53: #{tpu_custom_call.1} parent=5 // pred_check
      %p936 = pneg %p935
    $region54: #{tpu_custom_call.1} parent=5 // pred_check_branch
      %938 = sbr.rel (%p936) target = $region56
    $region55: #{tpu_custom_call.1} parent=5 // pred_region
      %s939 = ssub.s32 %s13, 2
      // Predicated region
      $region57: #{tpu_custom_call.1} parent=55 // pred_check
        %p940 = pneg %p194
      $region58: #{tpu_custom_call.1} parent=55 // pred_check_branch
        %942 = sbr.rel (%p940) target = $region60
      $region59: #{tpu_custom_call.1} parent=55 // pred_region
        %s943 = smul.u32 16, %s19
        %p944 = scmp.lt.s32.totalorder %s943, 47
        %s945 = scalar_select %p944, %s943, 47
        %s946 = smul.addr %s945, 8
        %s947 = scalar_lea.vmem %s7, %s946
      $region60: #{tpu_custom_call.1} parent=55 // pred_fallthru
        _
    $region56: #{tpu_custom_call.1} parent=5 // pred_fallthru
      _
  $region6: #{tpu_custom_call.1} parent=0 // loop_footer
    %s17 = sadd.s32 1, %s13
  $region7: #{tpu_custom_call.1} parent=0 // loop_footer_branch
    %12 = sbr.rel target = $region3
  $region8: #{tpu_custom_call.1} parent=0 // loop_exit
    _

</llo_original>
